<compile_context>
chip_gen: v5e
topology: v5e:2x2
jax: 0.10.0
libtpu: 0.0.40
codegen_flags: <defaults>
</compile_context>

<pallas_src>
import math

import jax
import jax.numpy as jnp
from jax.experimental import pallas as pl
from jax.experimental.pallas import tpu as pltpu


def _flatten_copy_kernel(x_ref, o_ref):
    # One batch tile per grid step: straight lane-dense VMEM copy.
    o_ref[...] = x_ref[...]


def _pick_batch_tile(batch):
    """Largest tile <= 256 that divides B and is a multiple of 8; otherwise
    fall back to the whole batch (block == full array dim is always legal)."""
    if batch % 8 == 0:
        tile = min(batch, 256)
        while batch % tile != 0:
            tile -= 8
        return max(tile, 8)
    return batch


@jax.jit
def flatten_forward(x):
    """Pallas equivalent of torch Flatten: (B, *rest) -> (B, prod(rest))."""
    batch = x.shape[0]
    d = math.prod(x.shape[1:])

    # Metadata-only collapse of the trailing dims (same as torch .view on a
    # contiguous tensor); the kernel below does the actual data movement.
    x2 = x.reshape(batch, d)

    batch_tile = _pick_batch_tile(batch)
    grid = (batch // batch_tile,)

    return pl.pallas_call(
        _flatten_copy_kernel,
        out_shape=jax.ShapeDtypeStruct((batch, d), x.dtype),
        grid_spec=pltpu.PrefetchScalarGridSpec(
            num_scalar_prefetch=0,
            grid=grid,
            in_specs=[pl.BlockSpec((batch_tile, d), lambda i: (i, 0))],
            out_specs=pl.BlockSpec((batch_tile, d), lambda i: (i, 0)),
        ),
        compiler_params=pltpu.CompilerParams(
            dimension_semantics=("parallel",)),
    )(x2)


if __name__ == "__main__":
    # Small shapes consistent with the module: batch=2, channels=4, 16x16.
    key = jax.random.PRNGKey(0)
    x = jax.random.normal(key, (2, 4, 16, 16), jnp.float32)

    y = flatten_forward(x)
    jax.block_until_ready(y)

    # Pure-JAX reference check (identical to torch's input.view(B, -1)).
    y_ref = x.reshape(x.shape[0], -1)
    assert y.shape == (2, 4 * 16 * 16), y.shape
    assert y.dtype == x.dtype
    assert jnp.array_equal(y, y_ref)

    print("KERNEL_OK")
</pallas_src>

<mosaic_0001>
module attributes {stable_mosaic.version = 11 : i64} {
  func.func @_flatten_copy_kernel(%arg0: i32, %arg1: memref<2x1024xf32, #tpu.memory_space<vmem>>, %arg2: memref<2x1024xf32, #tpu.memory_space<vmem>>) attributes {dimension_semantics = [#tpu.dimension_semantics<parallel>], iteration_bounds = array<i64: 1>, scalar_prefetch = 0 : i64, scratch_operands = 0 : i64, tpu.core_type = #tpu.core_type<tc>, window_params = [{transform_indices = @transform_0, window_bounds = array<i64: 2, 1024>}, {transform_indices = @transform_1, window_bounds = array<i64: 2, 1024>}]} {
    %c0 = arith.constant 0 : index
    %c0_0 = arith.constant 0 : index
    %0 = vector.load %arg1[%c0, %c0_0] : memref<2x1024xf32, #tpu.memory_space<vmem>>, vector<2x1024xf32>
    %c0_1 = arith.constant 0 : index
    %c0_2 = arith.constant 0 : index
    %1 = vector.load %arg2[%c0_1, %c0_2] : memref<2x1024xf32, #tpu.memory_space<vmem>>, vector<2x1024xf32>
    tpu.vector_store %arg2[%c0_1, %c0_2], %0 {strides = array<i32>} : memref<2x1024xf32, #tpu.memory_space<vmem>>, vector<2x1024xf32>,
    return
  }
  func.func @transform_0(%arg0: i32) -> (i32, i32) {
    %c0_i32 = arith.constant 0 : i32
    %c0_i32_0 = arith.constant 0 : i32
    return %arg0, %c0_i32 : i32, i32
  }
  func.func @transform_1(%arg0: i32) -> (i32, i32) {
    %c0_i32 = arith.constant 0 : i32
    %c0_i32_0 = arith.constant 0 : i32
    return %arg0, %c0_i32 : i32, i32
  }
}

</mosaic_0001>

<llo_original>
// kernel: flatten_forward.1
$region0: #{flatten_forward.1}
  #allocation0 [shape = 'u32[]', space=smem, size = 0x4, offset = 0x4, fixed_abs, tag = 'smem constant byte address 0x4 - core index']
  #allocation1 [shape = 'u32[72,128]{1,0:T(1,128)}', space=vmem, size = 0x9000, scoped, tag = 'internal scratch']
  %s0 = inlined_call_operand.vmem [shape: f32[2,1024], index: 0, kind: input, shape index: {}]
  %s1 = inlined_call_operand.hbm [shape: f32[2,1024], index: 1, kind: output, shape index: {}]
  %s2 = sld [smem:[#allocation0]]
  $region14: #{flatten_forward.1} parent=0
    _
  %s4 = ssub.s32 1, %s2
  %s5 = scalar_select 0, %s4, %s2
  $region1: #{flatten_forward.1} parent=0
    #allocation2 [shape = 'u8[8192]{0}', space=vmem, size = 0x2000, scoped, tag = 'output window, operand 0, single buffered']
    #allocation3 [shape = 's32[1]{0}', space=sflag, size = 0x4, scoped, tag = 'scoped memory for flatten_forward.1']
    %6 = vsyncpa [#allocation3], 0
    // Predicated region
    $region2: #{flatten_forward.1} parent=1 // pred_check
      _
    $region3: #{flatten_forward.1} parent=1 // pred_check_branch
      %8 = sbr.rel (0) target = $region5
    $region4: #{flatten_forward.1} parent=1 // pred_region
      _
    $region5: #{flatten_forward.1} parent=1 // pred_fallthru
      _
    %v9 = vld [vmem:[%s0] sm:$0xff]
    %v10 = vld [vmem:[%s0 + $0x8] sm:$0xff]
    %11 = vst [vmem:[#allocation2] sm:$0xff] %v9
    %12 = vst [vmem:[#allocation2 + $0x8] sm:$0xff] %v10
    // Predicated region
    $region6: #{flatten_forward.1} parent=1 // pred_check
      _
    $region7: #{flatten_forward.1} parent=1 // pred_check_branch
      %14 = sbr.rel (0) target = $region9
    $region8: #{flatten_forward.1} parent=1 // pred_region
      %16 = vsyncadd [#allocation3], 0
      %s18 = sshll.u32 [#allocation2], 4
      %s19 = int_to_ptr.vmem [resolvable:$true] %s18
      %s20 = sshll.u32 %s1, 4
      %s21 = int_to_ptr.hbm [resolvable:$true] %s20
      %23 = dma.vmem_to_hbm [thread:$0]  %s19, 256, %s21, [#allocation3]
    $region9: #{flatten_forward.1} parent=1 // pred_fallthru
      _
    // Predicated region
    $region10: #{flatten_forward.1} parent=1 // pred_check
      _
    $region11: #{flatten_forward.1} parent=1 // pred_check_branch
      %25 = sbr.rel (0) target = $region13
    $region12: #{flatten_forward.1} parent=1 // pred_region
      %27 = dma.done [#allocation3], 256
    $region13: #{flatten_forward.1} parent=1 // pred_fallthru
      _
    %28 = vsyncpa [#allocation3], 1

</llo_original>
